<compile_context>
chip_gen: v7x
topology: tpu7x:2x2x1
jax: 0.10.0
libtpu: 0.0.40
codegen_flags: <defaults>
</compile_context>

<pallas_src>
import functools

import jax
import jax.numpy as jnp
from jax.experimental import pallas as pl
from jax.experimental.pallas import tpu as pltpu


def _embed_kernel(patches_ref, w_ref, pos_ref, out_ref):
    # patches_ref: (TN, Kp)  tile of flattened patches for one image (compute dtype)
    # w_ref:       (Kp, Dp)  flattened conv weight, resident across the whole grid
    # pos_ref:     (TN, Dp)  position embedding (+ folded conv bias), f32, resident
    #                        across the inner batch axis
    # out_ref:     (TN, Dp)
    y = jnp.dot(patches_ref[...], w_ref[...], preferred_element_type=jnp.float32)
    out_ref[...] = (y + pos_ref[...]).astype(out_ref.dtype)


def _round_up(x, m):
    return (x + m - 1) // m * m


def _choose_row_tiling(n_rows):
    """Pick (tn, n_tiles) for the patch axis.

    Single TC (v5e/v6e): fewest grid steps / biggest tiles (>=512-row tiles reach
    ~85%+ of HBM roofline).  Dual TC (v7x): an even number of parallel tiles so the
    two cores get balanced work even at batch 1.  The extra step this costs on a
    single-TC chip is ~0.35 us, i.e. negligible.
    """
    if n_rows <= 512:
        n_tiles = 1
    elif n_rows <= 1024:
        n_tiles = 2                                   # e.g. N=729 -> 2 x 368
    else:
        n_tiles = _round_up(pl.cdiv(n_rows, 512), 2)  # even count, ~512-row tiles
    tn = _round_up(pl.cdiv(n_rows, n_tiles), 8)
    return tn, n_tiles


@functools.partial(jax.jit,
                   static_argnames=("patch_size", "compute_dtype", "out_dtype"))
def siglip_vision_embeddings(pixel_values, conv_weight, conv_bias, pos_embedding,
                             patch_size, compute_dtype=None, out_dtype=None):
    """
    pixel_values:  (B, C, H, W)  NCHW, matches the PyTorch module
    conv_weight:   (D, C, p, p)  PyTorch Conv2d weight layout
    conv_bias:     (D,)
    pos_embedding: (N, D) with N = (H//p) * (W//p)
    compute_dtype: dtype for matmul operands (e.g. jnp.bfloat16); f32 accumulation.
    out_dtype:     dtype of the returned embeddings (bf16 recommended when serving).
    returns:       (B, N, D)
    """
    B, C, H, W = pixel_values.shape
    D = conv_weight.shape[0]
    p = patch_size
    assert H % p == 0 and W % p == 0, "image size must be a multiple of patch_size"
    nh, nw = H // p, W // p
    N = nh * nw
    K = C * p * p
    assert pos_embedding.shape == (N, D), pos_embedding.shape

    if compute_dtype is None:
        compute_dtype = pixel_values.dtype
    if out_dtype is None:
        out_dtype = pixel_values.dtype

    # Padded problem sizes: lane-dense D, vreg/MXU-clean K, tile-exact N.
    Dp = _round_up(D, 128)
    Kp = _round_up(K, 128)
    tn, n_tiles = _choose_row_tiling(N)
    Np = tn * n_tiles

    # --- glue (pure layout / tiny tensors; heavy shuffle fuses into the input DMA) ---
    # Cast BEFORE the transpose so a materialized patch tensor (if fusion does not
    # kick in) is already in the narrow compute dtype.
    x = pixel_values.astype(compute_dtype)
    # Patches: (B, C, nh, p, nw, p) -> (B, nh, nw, C, p, p) -> (B, N, K)
    patches = x.reshape(B, C, nh, p, nw, p).transpose(0, 2, 4, 1, 3, 5).reshape(B, N, K)
    if Np != N or Kp != K:
        patches = jnp.pad(patches, ((0, 0), (0, Np - N), (0, Kp - K)))

    # Conv weight (D, C, p, p) -> (K, D): contraction order matches the patch flatten.
    w_flat = conv_weight.reshape(D, K).T.astype(compute_dtype)
    # Fold the conv bias into the position table (f32 epilogue add on the f32 acc).
    pos_plus_bias = (pos_embedding.astype(jnp.float32)
                     + conv_bias.astype(jnp.float32)[None, :])
    if Kp != K or Dp != D:
        w_flat = jnp.pad(w_flat, ((0, Kp - K), (0, Dp - D)))
    if Np != N or Dp != D:
        pos_plus_bias = jnp.pad(pos_plus_bias, ((0, Np - N), (0, Dp - D)))

    grid = (n_tiles, B)   # B innermost: pos tile block index constant -> stays resident

    # VMEM budget from the actual per-step footprint (double-buffered tiles + weight),
    # clamped so it overrides v5e's 16 MiB scoped default but respects v7x's 64 MiB.
    ic = jnp.dtype(compute_dtype).itemsize
    oc = jnp.dtype(out_dtype).itemsize
    tile_bytes = tn * Kp * ic + tn * Dp * oc + tn * Dp * 4
    weight_bytes = Kp * Dp * ic
    footprint = 2 * tile_bytes + 2 * weight_bytes
    vmem_limit = int(min(48 * 1024 * 1024, max(32 * 1024 * 1024, 2 * footprint)))

    cost = pl.CostEstimate(
        flops=2 * B * Np * Kp * Dp,
        transcendentals=0,
        bytes_accessed=(B * Np * Kp * ic          # patches
                        + Kp * Dp * ic            # weight (read once)
                        + Np * Dp * 4             # pos (+bias), resident across B
                        + B * Np * Dp * oc),      # output writeback
    )

    out = pl.pallas_call(
        _embed_kernel,
        out_shape=jax.ShapeDtypeStruct((B, Np, Dp), out_dtype),
        grid_spec=pltpu.PrefetchScalarGridSpec(
            num_scalar_prefetch=0,
            grid=grid,
            in_specs=[
                # per-image, per-N-tile patch block
                pl.BlockSpec((None, tn, Kp), lambda n, b: (b, n, 0)),
                # weight: constant index_map -> DMA'd once, resident in VMEM
                pl.BlockSpec((Kp, Dp), lambda n, b: (0, 0)),
                # pos(+bias): constant over the inner batch axis -> resident per N tile
                pl.BlockSpec((tn, Dp), lambda n, b: (n, 0)),
            ],
            out_specs=pl.BlockSpec((None, tn, Dp), lambda n, b: (b, n, 0)),
        ),
        compiler_params=pltpu.CompilerParams(
            dimension_semantics=("parallel", "parallel"),
            # Let XLA fuse the patch reshape/transpose/pad/cast into the input DMA
            # instead of materializing a separate HBM copy of the pixel tensor.
            allow_input_fusion=[True, False, False],
            vmem_limit_bytes=vmem_limit,
        ),
        cost_estimate=cost,
    )(patches, w_flat, pos_plus_bias)

    if Np != N or Dp != D:
        out = out[:, :N, :D]
    return out


def _reference(pixel_values, conv_weight, conv_bias, pos_embedding, p):
    """Pure-JAX reference matching the PyTorch forward."""
    conv = jax.lax.conv_general_dilated(
        pixel_values, conv_weight, window_strides=(p, p), padding="VALID",
        dimension_numbers=("NCHW", "OIHW", "NCHW"))
    B, D, nh, nw = conv.shape
    emb = conv.reshape(B, D, nh * nw).transpose(0, 2, 1)
    return emb + conv_bias[None, None, :] + pos_embedding[None]


if __name__ == "__main__":
    # Small config consistent with the module: image 16x16, patch 4 -> 16 patches.
    batch = 2
    num_channels = 3
    image_size = 16
    patch_size = 4
    hidden_size = 32
    num_patches = (image_size // patch_size) ** 2

    key = jax.random.PRNGKey(0)
    k_x, k_w, k_b, k_pos = jax.random.split(key, 4)

    pixel_values = jax.random.normal(
        k_x, (batch, num_channels, image_size, image_size), dtype=jnp.float32)
    conv_weight = jax.random.normal(
        k_w, (hidden_size, num_channels, patch_size, patch_size),
        dtype=jnp.float32) * 0.02
    conv_bias = jax.random.normal(k_b, (hidden_size,), dtype=jnp.float32) * 0.02
    pos_embedding = jax.random.normal(
        k_pos, (num_patches, hidden_size), dtype=jnp.float32) * 0.02

    ref = _reference(pixel_values, conv_weight, conv_bias, pos_embedding, patch_size)

    # f32 path (matches the PyTorch module's numerics).
    out = siglip_vision_embeddings(
        pixel_values, conv_weight, conv_bias, pos_embedding, patch_size)
    out = jax.block_until_ready(out)
    assert out.shape == (batch, num_patches, hidden_size), out.shape
    assert jnp.allclose(out, ref, atol=1e-5, rtol=1e-5), float(
        jnp.max(jnp.abs(out - ref)))

    # Serving path: bf16 operands AND bf16 output (halves every major HBM stream;
    # f32 MXU accumulation).  Deviates from PyTorch f32 numerics by bf16 rounding.
    out_bf16 = siglip_vision_embeddings(
        pixel_values, conv_weight, conv_bias, pos_embedding, patch_size,
        compute_dtype=jnp.bfloat16, out_dtype=jnp.bfloat16)
    out_bf16 = jax.block_until_ready(out_bf16)
    assert out_bf16.shape == (batch, num_patches, hidden_size)
    assert out_bf16.dtype == jnp.bfloat16
    assert jnp.allclose(out_bf16.astype(jnp.float32), ref, atol=5e-2), float(
        jnp.max(jnp.abs(out_bf16.astype(jnp.float32) - ref)))

    print("KERNEL_OK")
</pallas_src>

<mosaic_0001>
module attributes {stable_mosaic.version = 11 : i64} {
  func.func @_embed_kernel(%arg0: i32, %arg1: i32, %arg2: memref<1x16x128xf32, #tpu.memory_space<vmem>>, %arg3: memref<128x128xf32, #tpu.memory_space<vmem>>, %arg4: memref<16x128xf32, #tpu.memory_space<vmem>>, %arg5: memref<1x16x128xf32, #tpu.memory_space<vmem>>) attributes {dimension_semantics = [#tpu.dimension_semantics<parallel>, #tpu.dimension_semantics<parallel>], iteration_bounds = array<i64: 1, 2>, scalar_prefetch = 0 : i64, scratch_operands = 0 : i64, tpu.core_type = #tpu.core_type<tc>, window_params = [{transform_indices = @transform_0, window_bounds = array<i64: 1, 16, 128>}, {pipeline_mode = #tpu.pipeline_mode<synchronous>, transform_indices = @transform_1, window_bounds = array<i64: 128, 128>}, {transform_indices = @transform_2, window_bounds = array<i64: 16, 128>}, {transform_indices = @transform_3, window_bounds = array<i64: 1, 16, 128>}]} {
    %c0 = arith.constant 0 : index
    %c0_0 = arith.constant 0 : index
    %c0_1 = arith.constant 0 : index
    %0 = vector.load %arg2[%c0, %c0_0, %c0_1] : memref<1x16x128xf32, #tpu.memory_space<vmem>>, vector<1x16x128xf32>
    %1 = vector.shape_cast %0 : vector<1x16x128xf32> to vector<16x128xf32>
    %c0_2 = arith.constant 0 : index
    %c0_3 = arith.constant 0 : index
    %2 = vector.load %arg3[%c0_2, %c0_3] : memref<128x128xf32, #tpu.memory_space<vmem>>, vector<128x128xf32>
    %cst = arith.constant dense<0.000000e+00> : vector<16x128xf32>
    %3 = tpu.matmul %1, %2, %cst {dimension_numbers = #tpu.dot_dimension_numbers<[1], [0], [0], [1], [0, 0, 1, 1], [], []>} : vector<16x128xf32>, vector<128x128xf32>, vector<16x128xf32> -> vector<16x128xf32>
    %c0_4 = arith.constant 0 : index
    %c0_5 = arith.constant 0 : index
    %4 = vector.load %arg4[%c0_4, %c0_5] : memref<16x128xf32, #tpu.memory_space<vmem>>, vector<16x128xf32>
    %5 = arith.addf %3, %4 : vector<16x128xf32>
    %c0_6 = arith.constant 0 : index
    %c0_7 = arith.constant 0 : index
    %c0_8 = arith.constant 0 : index
    %6 = vector.load %arg5[%c0_6, %c0_7, %c0_8] : memref<1x16x128xf32, #tpu.memory_space<vmem>>, vector<1x16x128xf32>
    %7 = vector.shape_cast %6 : vector<1x16x128xf32> to vector<16x128xf32>
    %8 = vector.shape_cast %5 : vector<16x128xf32> to vector<1x16x128xf32>
    tpu.vector_store %arg5[%c0_6, %c0_7, %c0_8], %8 {strides = array<i32>} : memref<1x16x128xf32, #tpu.memory_space<vmem>>, vector<1x16x128xf32>,
    return
  }
  func.func @transform_0(%arg0: i32, %arg1: i32) -> (i32, i32, i32) {
    %c0_i32 = arith.constant 0 : i32
    %c0_i32_0 = arith.constant 0 : i32
    return %arg1, %arg0, %c0_i32 : i32, i32, i32
  }
  func.func @transform_1(%arg0: i32, %arg1: i32) -> (i32, i32) {
    %c0_i32 = arith.constant 0 : i32
    %c0_i32_0 = arith.constant 0 : i32
    %c0_i32_1 = arith.constant 0 : i32
    return %c0_i32, %c0_i32_0 : i32, i32
  }
  func.func @transform_2(%arg0: i32, %arg1: i32) -> (i32, i32) {
    %c0_i32 = arith.constant 0 : i32
    %c0_i32_0 = arith.constant 0 : i32
    return %arg0, %c0_i32 : i32, i32
  }
  func.func @transform_3(%arg0: i32, %arg1: i32) -> (i32, i32, i32) {
    %c0_i32 = arith.constant 0 : i32
    %c0_i32_0 = arith.constant 0 : i32
    return %arg1, %arg0, %c0_i32 : i32, i32, i32
  }
}

</mosaic_0001>

<llo_original>
// kernel: siglip_vision_embeddings.2
$region0: #{siglip_vision_embeddings.2}
  #allocation0 [shape = 'u32[]', space=smem, size = 0x4, offset = 0x4, fixed_abs, tag = 'smem constant byte address 0x4 - core index']
  #allocation1 [shape = 'u32[144,128]{1,0:T(1,128)}', space=vmem, size = 0x12000, scoped, tag = 'internal scratch']
  #allocation2 [shape = 'u32[2048]{0}', space=vmem, size = 0x2000, scoped, tag = 'scoped memory for siglip_vision_embeddings.2']
  #allocation3 [shape = 'u32[2048]{0}', space=vmem, size = 0x2000, scoped, tag = 'scoped memory for siglip_vision_embeddings.2']
  #allocation4 [shape = 'u32[2048]{0}', space=vmem, size = 0x2000, scoped, tag = 'scoped memory for siglip_vision_embeddings.2']
  #allocation5 [shape = 'u32[2048]{0}', space=vmem, size = 0x2000, scoped, tag = 'scoped memory for siglip_vision_embeddings.2']
  #allocation6 [shape = 'u32[2048]{0}', space=vmem, size = 0x2000, scoped, tag = 'scoped memory for siglip_vision_embeddings.2']
  %s0 = inlined_call_operand.vmem [shape: f32[128,128], index: 0, kind: input, shape index: {}]
  %s1 = inlined_call_operand.vmem [shape: f32[16,128], index: 1, kind: input, shape index: {}]
  %s2 = inlined_call_operand.vmem [shape: f32[2,16,48], index: 2, kind: input, shape index: {}]
  %s3 = inlined_call_operand.<no memory space> [shape: f32[], index: 3, kind: input, shape index: {}]
  %s4 = inlined_call_operand.hbm [shape: f32[2,16,128], index: 4, kind: output, shape index: {}]
  %s5 = sld [smem:[#allocation0]]
  $region45: #{siglip_vision_embeddings.2} parent=0
    _
  %s7 = ssub.s32 1, %s5
  %s8 = scalar_select 0, %s7, %s5
  %v9 = vstv %s3
  $region1: #{siglip_vision_embeddings.2} parent=0
    #allocation7 [shape = 'u8[16384]{0}', space=vmem, size = 0x4000, scoped, tag = 'output window, operand 0']
    #allocation8 [shape = 's32[2]{0}', space=sflag, size = 0x8, scoped, tag = 'scoped memory for siglip_vision_embeddings.2']
    %10 = vsyncpa [#allocation8], 0
    %s11 = scalar_lea.sflag [#allocation8], 1
    %12 = vsyncpa %s11, 0
    loop: start=0, step=1, limit=4
    $region2: #{siglip_vision_embeddings.2} parent=1 // loop_pre_header
      _
    $region3: #{siglip_vision_embeddings.2} parent=1 // loop_header
      %s14 = sphi 0, %s18
      %p15 = scmp.ge.s32.totalorder %s14, 4
      %s21 = sphi 0, %s33
      %s22 = sphi 0, %s29
      %s23 = sphi 0, %s21
      %s24 = sphi 0, %s22
      %s25 = sphi 0, %s23
      %s26 = sphi 0, %s24
      %s38 = sphi 0, %s40
      %s41 = sphi 0, %s38
      %s42 = sphi 0, %s41
      %s58 = sphi 0, %s42
      %s62 = sphi 0, %s62
      %s64 = sphi 0, %s62
      %s65 = sphi 0, %s64
      %s79 = sphi 0, %s65
      %s85 = sphi 0, %s87
      %s88 = sphi 0, %s85
      %s89 = sphi 0, %s88
      %s105 = sphi 0, %s89
      %s113 = sphi 0, %s115
      %s116 = sphi 0, %s113
      %s117 = sphi 0, %s116
      %s133 = sphi 0, %s117
    $region4: #{siglip_vision_embeddings.2} parent=1 // loop_header_branch
      %17 = sbr.rel (%p15) target = $region8
    $region5: #{siglip_vision_embeddings.2} parent=1 // loop_body
      %s19 = ssub.s32 %s14, 1
      %s20 = ssub.s32 %s14, 2
      %s27 = sadd.s32 1, %s22
      %p28 = scmp.ge.s32.totalorder %s27, 2
      %s29 = scalar_select %p28, 0, %s27
      %s30 = sadd.s32 1, %s21
      %s31 = scalar_select %p28, %s30, %s21
      %p32 = scmp.ge.s32.totalorder %s31, 1
      %s33 = scalar_select %p32, 0, %s31
      %s34 = ssub.s32 %s22, %s29
      %s35 = ssub.s32 %s21, %s33
      %s36 = sor.u32 %s34, %s35
      %p37 = scmp.eq.s32.totalorder %s36, 0
      %s39 = sadd.s32 %s38, 1
      %s40 = scalar_select %p37, %s38, %s39
      %p43 = pneg %p37
      %p44 = scmp.eq.s32.totalorder %s14, 1
      %p45 = por %p43, %p44
      %p46 = scmp.ne.s32.totalorder %s38, %s41
      %p47 = scmp.eq.s32.totalorder %s14, 0
      %p48 = por %p46, %p47
      %p49 = scmp.ne.s32.totalorder %s38, %s41
      %p50 = scmp.eq.s32.totalorder %s19, 1
      %p51 = por %p49, %p50
      %p52 = scmp.ne.s32.totalorder %s41, %s42
      %p53 = scmp.eq.s32.totalorder %s19, 0
      %p54 = por %p52, %p53
      %p55 = scmp.ne.s32.totalorder %s41, %s42
      %p56 = scmp.eq.s32.totalorder %s20, 1
      %p57 = por %p55, %p56
      %p59 = scmp.ne.s32.totalorder %s42, %s58
      %p60 = scmp.eq.s32.totalorder %s20, 0
      %p61 = por %p59, %p60
      %s63 = sadd.s32 %s62, 1
      %p66 = scmp.eq.s32.totalorder %s14, 1
      %p67 = scmp.ne.s32.totalorder %s62, %s64
      %p68 = scmp.eq.s32.totalorder %s14, 0
      %p69 = por %p67, %p68
      %p70 = scmp.ne.s32.totalorder %s62, %s64
      %p71 = scmp.eq.s32.totalorder %s19, 1
      %p72 = por %p70, %p71
      %p73 = scmp.ne.s32.totalorder %s64, %s65
      %p74 = scmp.eq.s32.totalorder %s19, 0
      %p75 = por %p73, %p74
      %p76 = scmp.ne.s32.totalorder %s64, %s65
      %p77 = scmp.eq.s32.totalorder %s20, 1
      %p78 = por %p76, %p77
      %p80 = scmp.ne.s32.totalorder %s65, %s79
      %p81 = scmp.eq.s32.totalorder %s20, 0
      %p82 = por %p80, %p81
      %s83 = ssub.s32 %s21, %s33
      %p84 = scmp.eq.s32.totalorder %s83, 0
      %s86 = sadd.s32 %s85, 1
      %s87 = scalar_select %p84, %s85, %s86
      %p90 = pneg %p84
      %p91 = scmp.eq.s32.totalorder %s14, 1
      %p92 = por %p90, %p91
      %p93 = scmp.ne.s32.totalorder %s85, %s88
      %p94 = scmp.eq.s32.totalorder %s14, 0
      %p95 = por %p93, %p94
      %p96 = scmp.ne.s32.totalorder %s85, %s88
      %p97 = scmp.eq.s32.totalorder %s19, 1
      %p98 = por %p96, %p97
      %p99 = scmp.ne.s32.totalorder %s88, %s89
      %p100 = scmp.eq.s32.totalorder %s19, 0
      %p101 = por %p99, %p100
      %p102 = scmp.ne.s32.totalorder %s88, %s89
      %p103 = scmp.eq.s32.totalorder %s20, 1
      %p104 = por %p102, %p103
      %p106 = scmp.ne.s32.totalorder %s89, %s105
      %p107 = scmp.eq.s32.totalorder %s20, 0
      %p108 = por %p106, %p107
      %s109 = ssub.s32 %s22, %s29
      %s110 = ssub.s32 %s21, %s33
      %s111 = sor.u32 %s109, %s110
      %p112 = scmp.eq.s32.totalorder %s111, 0
      %s114 = sadd.s32 %s113, 1
      %s115 = scalar_select %p112, %s113, %s114
      %p118 = pneg %p112
      %p119 = scmp.eq.s32.totalorder %s14, 1
      %p120 = por %p118, %p119
      %p121 = scmp.ne.s32.totalorder %s113, %s116
      %p122 = scmp.eq.s32.totalorder %s14, 0
      %p123 = por %p121, %p122
      %p124 = scmp.ne.s32.totalorder %s113, %s116
      %p125 = scmp.eq.s32.totalorder %s19, 1
      %p126 = por %p124, %p125
      %p127 = scmp.ne.s32.totalorder %s116, %s117
      %p128 = scmp.eq.s32.totalorder %s19, 0
      %p129 = por %p127, %p128
      %p130 = scmp.ne.s32.totalorder %s116, %s117
      %p131 = scmp.eq.s32.totalorder %s20, 1
      %p132 = por %p130, %p131
      %p134 = scmp.ne.s32.totalorder %s117, %s133
      %p135 = scmp.eq.s32.totalorder %s20, 0
      %p136 = por %p134, %p135
      %p137 = scmp.le.s32.totalorder 1, %s14
      %p138 = scmp.lt.s32.totalorder %s14, 3
      %p139 = pnand %p137, %p138
      %p140 = pneg %p139
      // Predicated region
      $region9: #{siglip_vision_embeddings.2} parent=5 // pred_check
        _
      $region10: #{siglip_vision_embeddings.2} parent=5 // pred_check_branch
        %142 = sbr.rel (%p139) target = $region12
      $region11: #{siglip_vision_embeddings.2} parent=5 // pred_region
        %s143 = ssub.s32 %s14, 1
        // Predicated region
        $region13: #{siglip_vision_embeddings.2} parent=11 // pred_check
          %p144 = pneg %p75
        $region14: #{siglip_vision_embeddings.2} parent=11 // pred_check_branch
          %146 = sbr.rel (%p144) target = $region16
        $region15: #{siglip_vision_embeddings.2} parent=11 // pred_region
          _
        $region16: #{siglip_vision_embeddings.2} parent=11 // pred_fallthru
          _
        // Predicated region
        $region17: #{siglip_vision_embeddings.2} parent=11 // pred_check
          %p147 = pneg %p101
        $region18: #{siglip_vision_embeddings.2} parent=11 // pred_check_branch
          %149 = sbr.rel (%p147) target = $region20
        $region19: #{siglip_vision_embeddings.2} parent=11 // pred_region
          %s150 = smul.u32 2, %s23
          %p151 = scmp.lt.s32.totalorder %s150, 1
          %s152 = scalar_select %p151, %s150, 1
          %s153 = smul.addr %s152, 8
          %s154 = scalar_lea.vmem %s1, %s153
          %s155 = smul.u32 2, %s23
        $region20: #{siglip_vision_embeddings.2} parent=11 // pred_fallthru
          _
      $region12: #{siglip_vision_embeddings.2} parent=5 // pred_fallthru
        _
      %p156 = scmp.lt.s32.totalorder %s14, 2
      // Predicated region
      $region21: #{siglip_vision_embeddings.2} parent=5 // pred_check
        %p157 = pneg %p156
      $region22: #{siglip_vision_embeddings.2} parent=5 // pred_check_branch
        %159 = sbr.rel (%p157) target = $region24
      $region23: #{siglip_vision_embeddings.2} parent=5 // pred_region
        // Predicated region
        $region25: #{siglip_vision_embeddings.2} parent=23 // pred_check
          %p160 = pneg %p48
        $region26: #{siglip_vision_embeddings.2} parent=23 // pred_check_branch
          %162 = sbr.rel (%p160) target = $region28
        $region27: #{siglip_vision_embeddings.2} parent=23 // pred_region
          %s163 = smul.u32 2, %s21
          %p164 = scmp.lt.s32.totalorder %s22, 1
          %s165 = scalar_select %p164, %s22, 1
          %p166 = scmp.lt.s32.totalorder %s163, 1
          %s167 = scalar_select %p166, %s163, 1
          %s168 = smul.addr %s165, 2
          %s169 = sadd.s32 %s167, %s168
          %s170 = smul.addr %s169, 8
          %s171 = scalar_lea.vmem %s2, %s170
          %s172 = smul.u32 2, %s21
        $region28: #{siglip_vision_embeddings.2} parent=23 // pred_fallthru
          _
      $region24: #{siglip_vision_embeddings.2} parent=5 // pred_fallthru
        _
      %p173 = scmp.le.s32.totalorder 1, %s14
      %p174 = scmp.lt.s32.totalorder %s14, 3
      %p175 = pnand %p173, %p174
      %p176 = pneg %p175
      // Predicated region
      $region29: #{siglip_vision_embeddings.2} parent=5 // pred_check
        _
      $region30: #{siglip_vision_embeddings.2} parent=5 // pred_check_branch
        %178 = sbr.rel (%p175) target = $region32
      $region31: #{siglip_vision_embeddings.2} parent=5 // pred_region
        #allocation9 [shape = 'u8[8192]{0}', space=vmem, size = 0x2000, dematerialized = true, scoped, tag = 'FusionAdapter Buffer %fusion.1 = f32[2,16,128]{2,1,0:T(8,128)} fusion(%param_2.1, %param_3), kind=kLoop, calls=%fused_computation.2.clone, metadata={op_name="jit(siglip_vision_embeddings)/jit(_pad)/pad" stack_frame_id=8}']
        %s179 = ssub.s32 %s14, 1
        %s180 = smul.u32 2, %s23
        %p181 = scmp.lt.s32.totalorder %s24, 1
        %s182 = scalar_select %p181, %s24, 1
        %p183 = scmp.lt.s32.totalorder %s180, 1
        %s184 = scalar_select %p183, %s180, 1
        %s185 = smul.addr %s182, 2
        %s186 = sadd.s32 %s184, %s185
        %s187 = smul.addr %s186, 8
        %s188 = scalar_lea.vmem %s2, %s187
        %p189 = pneg %p54
        %p190 = pneg %p51
        %p191 = pneg %p75
        %p192 = pneg %p72
        %s193 = smul.u32 2, %s23
        %p194 = scmp.lt.s32.totalorder %s193, 1
        %s195 = scalar_select %p194, %s193, 1
        %s196 = smul.addr %s195, 8
        %s197 = scalar_lea.vmem %s1, %s196
        %p198 = pneg %p101
        %p199 = pneg %p98
        %p200 = pneg %p129
        %p201 = pneg %p126
        %s202 = sand.u32 %s116, 1
        %s203 = scalar_lea.sflag [#allocation8], %s202
        %s204 = sand.u32 %s116, 1
        %s205 = smul.addr %s204, 16
        %s206 = scalar_lea.vmem [#allocation7], %s205
        %s207 = smul.u32 2, %s23
        %p208 = scmp.lt.s32.totalorder %s24, 1
        %s209 = scalar_select %p208, %s24, 1
        %p210 = scmp.lt.s32.totalorder %s207, 1
        %s211 = scalar_select %p210, %s207, 1
        %s212 = smul.addr %s209, 2
        %s213 = sadd.s32 %s211, %s212
        %s214 = smul.addr %s213, 8
        %s215 = scalar_lea.vmem %s2, %s214
        %s216 = smul.u32 2, %s23
        %s217 = smul.u32 2, %s23
        %p218 = scmp.lt.s32.totalorder %s217, 1
        %s219 = scalar_select %p218, %s217, 1
        %s220 = smul.addr %s219, 8
        %s221 = scalar_lea.vmem %s1, %s220
        %s222 = smul.u32 2, %s23
        %s223 = smul.u32 2, %s23
        %v224 = vld [vmem:[%s215] sm:$0xff]
        %v225 = vlaneseq
        %v226 = vand.u32 %v225, 127
        %vm228 = vcmp.lt.s32.totalorder %v226, 48
        %v229 = vsel %vm228, %v224, %v9
        %231 = vst [vmem:[#allocation9] sm:$0xff] %v229
        %s232 = scalar_lea.vmem %s215, 8
        %v233 = vld [vmem:[%s232] sm:$0xff]
        %v234 = vlaneseq
        %v235 = vand.u32 %v234, 127
        %vm237 = vcmp.lt.s32.totalorder %v235, 48
        %v238 = vsel %vm237, %v233, %v9
        %s239 = scalar_lea.vmem [#allocation9], 8
        %241 = vst [vmem:[%s239] sm:$0xff] %v238
        %v242 = vld [vmem:[#allocation9] sm:$0xff]
        %v243 = vld [vmem:[#allocation9 + $0x8] sm:$0xff]
        %v244 = vld [vmem:[%s0] sm:$0xff]
        %v245 = vld [vmem:[%s0 + $0x8] sm:$0xff]
        %v246 = vld [vmem:[%s0 + $0x10] sm:$0xff]
        %v247 = vld [vmem:[%s0 + $0x18] sm:$0xff]
        %v248 = vld [vmem:[%s0 + $0x20] sm:$0xff]
        %v249 = vld [vmem:[%s0 + $0x28] sm:$0xff]
        %v250 = vld [vmem:[%s0 + $0x30] sm:$0xff]
        %v251 = vld [vmem:[%s0 + $0x38] sm:$0xff]
        %v252 = vld [vmem:[%s0 + $0x40] sm:$0xff]
        %v253 = vld [vmem:[%s0 + $0x48] sm:$0xff]
        %v254 = vld [vmem:[%s0 + $0x50] sm:$0xff]
        %v255 = vld [vmem:[%s0 + $0x58] sm:$0xff]
        %v256 = vld [vmem:[%s0 + $0x60] sm:$0xff]
        %v257 = vld [vmem:[%s0 + $0x68] sm:$0xff]
        %v258 = vld [vmem:[%s0 + $0x70] sm:$0xff]
        %v259 = vld [vmem:[%s0 + $0x78] sm:$0xff]
        %v260 = vld [vmem:[%s221] sm:$0xff]
        %v261 = vld [vmem:[%s221 + $0x8] sm:$0xff]
        %262 = vmatprep.subr.mxu0 0.0
        %263 = vmatpush1.msra.mxu0 %v244
        %264 = vmatprep.subr.mxu0 0.0
        %265 = vmatpush1.msra.mxu0 %v245
        %266 = vmatprep.subr.mxu0 0.0
        %267 = vmatpush1.msra.mxu0 %v246
        %268 = vmatprep.subr.mxu0 0.0
        %269 = vmatpush1.msra.mxu0 %v247
        %270 = vmatprep.subr.mxu0 0.0
        %271 = vmatpush1.msra.mxu0 %v248
        %272 = vmatprep.subr.mxu0 0.0
        %273 = vmatpush1.msra.mxu0 %v249
        %274 = vmatprep.subr.mxu0 0.0
        %275 = vmatpush1.msra.mxu0 %v250
        %276 = vmatprep.subr.mxu0 0.0
        %277 = vmatpush1.msra.mxu0 %v251
        %278 = vmatprep.subr.mxu0 0.0
        %279 = vmatpush1.msra.mxu0 %v252
        %280 = vmatprep.subr.mxu0 0.0
        %281 = vmatpush1.msra.mxu0 %v253
        %282 = vmatprep.subr.mxu0 0.0
        %283 = vmatpush1.msra.mxu0 %v254
        %284 = vmatprep.subr.mxu0 0.0
        %285 = vmatpush1.msra.mxu0 %v255
        %286 = vmatprep.subr.mxu0 0.0
        %287 = vmatpush1.msra.mxu0 %v256
        %288 = vmatprep.subr.mxu0 0.0
        %289 = vmatpush1.msra.mxu0 %v257
        %290 = vmatprep.subr.mxu0 0.0
        %291 = vmatpush1.msra.mxu0 %v258
        %292 = vmatprep.subr.mxu0 0.0
        %293 = vmatpush1.msra.mxu0 %v259
        %294 = vmatprep.subr.mxu0 0.0
        %295 = vmatpush1.msra.mxu0 0.0
        %296 = vmatprep.subr.mxu0 0.0
        %297 = vmatpush1.msra.mxu0 0.0
        %298 = vmatprep.subr.mxu0 0.0
        %299 = vmatpush1.msra.mxu0 0.0
        %300 = vmatprep.subr.mxu0 0.0
        %301 = vmatpush1.msra.mxu0 0.0
        %302 = vmatprep.subr.mxu0 0.0
        %303 = vmatpush1.msra.mxu0 0.0
        %304 = vmatprep.subr.mxu0 0.0
        %305 = vmatpush1.msra.mxu0 0.0
        %306 = vmatprep.subr.mxu0 0.0
        %307 = vmatpush1.msra.mxu0 0.0
        %308 = vmatprep.subr.mxu0 0.0
        %309 = vmatpush1.msra.mxu0 0.0
        %310 = vmatprep.subr.mxu0 0.0
        %311 = vmatpush1.msra.mxu0 0.0
        %312 = vmatprep.subr.mxu0 0.0
        %313 = vmatpush1.msra.mxu0 0.0
        %314 = vmatprep.subr.mxu0 0.0
        %315 = vmatpush1.msra.mxu0 0.0
        %316 = vmatprep.subr.mxu0 0.0
        %317 = vmatpush1.msra.mxu0 0.0
        %318 = vmatprep.subr.mxu0 0.0
        %319 = vmatpush1.msra.mxu0 0.0
        %320 = vmatprep.subr.mxu0 0.0
        %321 = vmatpush1.msra.mxu0 0.0
        %322 = vmatprep.subr.mxu0 0.0
        %323 = vmatpush1.msra.mxu0 0.0
        %324 = vmatprep.subr.mxu0 0.0
        %325 = vmatpush1.msra.mxu0 0.0
        %326 = vmatprep.mubr.f32.mxu0 0.0
        %327 = vmatmul.mubr.f32.gmra.mrb[0].mxu0 %v242
        %v328 = vpop.f32.mrb[0].mxu0
        %v329 = vadd.f32 %v260, %v328
        %v330 = vpop.f32.mrb[0].mxu0
        %331 = vmatprep.mubr.f32.mxu0 0.0
        %332 = vmatmul.mubr.f32.gmra.mrb[0].mxu0 %v243
        %v333 = vpop.f32.mrb[0].mxu0
        %v334 = vadd.f32 %v261, %v333
        %v335 = vpop.f32.mrb[0].mxu0
        %336 = vdwg.mxu0
        %337 = vst [vmem:[%s206] sm:$0xff] %v329
        %338 = vst [vmem:[%s206 + $0x8] sm:$0xff] %v334
        %s339 = sand.u32 %s116, 1
        %s340 = scalar_lea.sflag [#allocation8], %s339
        %s341 = sand.u32 %s116, 1
        %s342 = smul.addr %s341, 16
        %s343 = scalar_lea.vmem [#allocation7], %s342
        // Predicated region
        $region33: #{siglip_vision_embeddings.2} parent=31 // pred_check
          %p344 = pneg %p126
        $region34: #{siglip_vision_embeddings.2} parent=31 // pred_check_branch
          %346 = sbr.rel (%p344) target = $region36
        $region35: #{siglip_vision_embeddings.2} parent=31 // pred_region
          %s347 = smul.u32 2, %s23
          %s349 = ssub.s32 256, 256
          %350 = vsyncadd %s340, %s349
          %s351 = smul.addr %s24, 2
          %s352 = sadd.s32 %s347, %s351
          %s353 = smul.addr %s352, 128
          %s354 = scalar_lea.hbm %s4, %s353
          %s355 = sshll.u32 %s343, 4
          %s356 = int_to_ptr.vmem [resolvable:$true] %s355
          %361 = dma.vmem_to_hbm [thread:$0]  %s356, 256, %s354, %s340, 128, 128, 8
        $region36: #{siglip_vision_embeddings.2} parent=31 // pred_fallthru
          _
      $region32: #{siglip_vision_embeddings.2} parent=5 // pred_fallthru
        _
      %p362 = scmp.le.s32.totalorder 2, %s14
      // Predicated region
      $region37: #{siglip_vision_embeddings.2} parent=5 // pred_check
        %p363 = pneg %p362
      $region38: #{siglip_vision_embeddings.2} parent=5 // pred_check_branch
        %365 = sbr.rel (%p363) target = $region40
      $region39: #{siglip_vision_embeddings.2} parent=5 // pred_region
        %s366 = ssub.s32 %s14, 2
        // Predicated region
        $region41: #{siglip_vision_embeddings.2} parent=39 // pred_check
          %p367 = pneg %p132
        $region42: #{siglip_vision_embeddings.2} parent=39 // pred_check_branch
          %369 = sbr.rel (%p367) target = $region44
        $region43: #{siglip_vision_embeddings.2} parent=39 // pred_region
          %s370 = sand.u32 %s117, 1
          %s371 = scalar_lea.sflag [#allocation8], %s370
          %s372 = sand.u32 %s117, 1
          %s373 = smul.addr %s372, 16
          %s374 = scalar_lea.vmem [#allocation7], %s373
          %375 = dma.done %s371, 256
        $region44: #{siglip_vision_embeddings.2} parent=39 // pred_fallthru
          _
      $region40: #{siglip_vision_embeddings.2} parent=5 // pred_fallthru
        _
    $region6: #{siglip_vision_embeddings.2} parent=1 // loop_footer
      %s18 = sadd.s32 1, %s14
    $region7: #{siglip_vision_embeddings.2} parent=1 // loop_footer_branch
      %13 = sbr.rel target = $region3
    $region8: #{siglip_vision_embeddings.2} parent=1 // loop_exit
      _
    %376 = vsyncpa [#allocation8], 1
    %s377 = scalar_lea.sflag [#allocation8], 1
    %378 = vsyncpa %s377, 1

</llo_original>
